<compile_context>
chip_gen: v6e
topology: v6e:2x2x1
jax: 0.10.0
libtpu: 0.0.40
codegen_flags: <defaults>
</compile_context>

<pallas_src>
import functools

import jax
import jax.numpy as jnp
from jax import lax
from jax.experimental import pallas as pl
from jax.experimental.pallas import tpu as pltpu


def _round_up(x, m):
    return (x + m - 1) // m * m


def fm_kernel(x_ref, wt_ref, v2_ref, b_ref, o_ref, acc_xw, acc_x2, *, k):
    # x_ref : (tb, tf)  batch-tile of inputs
    # wt_ref: (Kp, tf)  rows 0..k-1 = V^T, row k = linear weights, remaining rows zero
    # v2_ref: (8, tf)   row 0 = sum_k V^2 per feature, remaining rows zero
    # b_ref : (1,)      bias scalar in SMEM
    # o_ref : (1, tb)   lane-dense output row for this batch tile
    # acc_xw: (Kp, tb)  f32 accumulator for Wt @ X^T over feature tiles
    # acc_x2: (8, tb)   f32 accumulator for v2sum @ (X^2)^T over feature tiles
    fj = pl.program_id(1)
    nf = pl.num_programs(1)

    @pl.when(fj == 0)
    def _init():
        acc_xw[...] = jnp.zeros_like(acc_xw)
        acc_x2[...] = jnp.zeros_like(acc_x2)

    x = x_ref[...]
    wt = wt_ref[...]
    v2 = v2_ref[...]

    # "NT" matmuls: contract the feature (last) dim of both operands -> (rows, tb).
    nt = (((1,), (1,)), ((), ()))
    acc_xw[...] += lax.dot_general(wt, x, nt, preferred_element_type=jnp.float32)
    acc_x2[...] += lax.dot_general(v2, x * x, nt, preferred_element_type=jnp.float32)

    @pl.when(fj == nf - 1)
    def _finalize():
        acc = acc_xw[...]                                     # (Kp, tb)
        r = lax.broadcasted_iota(jnp.int32, acc.shape, 0)
        sq_c = jnp.where(r < k, 0.5, 0.0)                     # 0.5 * (X@V)^2 rows
        lin_c = jnp.where(r == k, 1.0, 0.0)                   # linear-term row
        main = jnp.sum(sq_c * acc * acc + lin_c * acc, axis=0, keepdims=True)   # (1, tb)
        x2term = jnp.sum(acc_x2[...], axis=0, keepdims=True)                    # (1, tb)
        o_ref[...] = (b_ref[0] + main - 0.5 * x2term).astype(o_ref.dtype)


def factorization_machine(x, linear_w, factors, bias, *, tb=None, tf=None):
    """x: (B, F), linear_w: (F,), factors: (F, K), bias: (1,) -> (B,) float32."""
    x = jnp.asarray(x, jnp.float32)
    linear_w = jnp.asarray(linear_w, jnp.float32)
    factors = jnp.asarray(factors, jnp.float32)
    bias = jnp.asarray(bias, jnp.float32).reshape(1)

    B, F = x.shape
    K = factors.shape[1]
    Kp = _round_up(K + 1, 8)

    # Tile selection: batch tile (rows -> output lanes), feature tile (reduction axis).
    if tb is None:
        tb = min(_round_up(B, 8), 512)
    if tf is None:
        tf = F if F <= 2048 else 1024
    B_pad = _round_up(B, tb)
    F_pad = _round_up(F, tf)

    # One-time wrapper-side weight prep: fold linear into the factor matmul and collapse
    # V^2 to its K-sum (zero padding contributes nothing).
    wt = jnp.zeros((Kp, F_pad), jnp.float32)
    wt = wt.at[:K, :F].set(factors.T)
    wt = wt.at[K, :F].set(linear_w)
    v2 = jnp.zeros((8, F_pad), jnp.float32)
    v2 = v2.at[0, :F].set(jnp.sum(factors * factors, axis=1))

    if B_pad != B or F_pad != F:
        x = jnp.pad(x, ((0, B_pad - B), (0, F_pad - F)))

    grid = (B_pad // tb, F_pad // tf)

    out = pl.pallas_call(
        functools.partial(fm_kernel, k=K),
        out_shape=jax.ShapeDtypeStruct((B_pad // tb, tb), jnp.float32),
        grid_spec=pltpu.PrefetchScalarGridSpec(
            num_scalar_prefetch=0,
            grid=grid,
            in_specs=[
                pl.BlockSpec((tb, tf), lambda i, j: (i, j)),          # X tile
                pl.BlockSpec((Kp, tf), lambda i, j: (0, j)),          # [V^T ; linear]
                pl.BlockSpec((8, tf), lambda i, j: (0, j)),           # v2sum row
                pl.BlockSpec(memory_space=pltpu.MemorySpace.SMEM),    # bias scalar
            ],
            out_specs=pl.BlockSpec((1, tb), lambda i, j: (i, 0)),
            scratch_shapes=[
                pltpu.VMEM((Kp, tb), jnp.float32),
                pltpu.VMEM((8, tb), jnp.float32),
            ],
        ),
        compiler_params=pltpu.CompilerParams(
            dimension_semantics=("parallel", "arbitrary"),
            vmem_limit_bytes=32 * 1024 * 1024,
        ),
    )(x, wt, v2, bias)

    return out.reshape(-1)[:B]


def fm_reference(x, linear_w, factors, bias):
    linear_term = x @ linear_w
    interactions = 0.5 * jnp.sum(
        (x @ factors) ** 2 - (x ** 2) @ (factors ** 2), axis=1)
    return bias[0] + linear_term + interactions


if __name__ == "__main__":
    key = jax.random.PRNGKey(0)
    kx, kv, kw, kb, kx2, kv2, kw2, kb2 = jax.random.split(key, 8)

    # Small shape consistent with the module: batch=8, n_features=32, k=16.
    B, F, K = 8, 32, 16
    x = jax.random.normal(kx, (B, F), jnp.float32)
    factors = jax.random.normal(kv, (F, K), jnp.float32)
    # Module initializes linear/bias to zeros; use non-zero (deterministic) values so
    # the folded linear/bias paths are actually exercised by the check.
    linear_w = 0.1 * jax.random.normal(kw, (F,), jnp.float32)
    bias = 0.1 * jax.random.normal(kb, (1,), jnp.float32)

    out = jax.block_until_ready(factorization_machine(x, linear_w, factors, bias))
    ref = fm_reference(x, linear_w, factors, bias)
    assert out.shape == (B,)
    assert jnp.allclose(out, ref, atol=1e-3, rtol=1e-3), (out, ref)

    # Larger shape: exercises batch tiling, feature-axis accumulation and padding.
    B2, F2, K2 = 1000, 2500, 16
    x2 = 0.1 * jax.random.normal(kx2, (B2, F2), jnp.float32)
    factors2 = 0.05 * jax.random.normal(kv2, (F2, K2), jnp.float32)
    linear2 = 0.05 * jax.random.normal(kw2, (F2,), jnp.float32)
    bias2 = jax.random.normal(kb2, (1,), jnp.float32)

    out2 = jax.block_until_ready(factorization_machine(x2, linear2, factors2, bias2))
    ref2 = fm_reference(x2, linear2, factors2, bias2)
    assert out2.shape == (B2,)
    assert jnp.allclose(out2, ref2, atol=2e-2, rtol=2e-2), (
        float(jnp.max(jnp.abs(out2 - ref2))))

    print("KERNEL_OK")
</pallas_src>

<mosaic_0001>
module attributes {stable_mosaic.version = 11 : i64} {
  func.func @fm_kernel(%arg0: i32, %arg1: i32, %arg2: memref<8x32xf32, #tpu.memory_space<vmem>>, %arg3: memref<24x32xf32, #tpu.memory_space<vmem>>, %arg4: memref<8x32xf32, #tpu.memory_space<vmem>>, %arg5: memref<1xf32, #tpu.memory_space<smem>>, %arg6: memref<1x8xf32, #tpu.memory_space<vmem>>, %arg7: memref<24x8xf32, #tpu.memory_space<vmem>>, %arg8: memref<8x8xf32, #tpu.memory_space<vmem>>) attributes {dimension_semantics = [#tpu.dimension_semantics<parallel>, #tpu.dimension_semantics<arbitrary>], iteration_bounds = array<i64: 1, 1>, scalar_prefetch = 0 : i64, scratch_operands = 2 : i64, tpu.core_type = #tpu.core_type<tc>, window_params = [{transform_indices = @transform_0, window_bounds = array<i64: 8, 32>}, {transform_indices = @transform_1, window_bounds = array<i64: 24, 32>}, {transform_indices = @transform_2, window_bounds = array<i64: 8, 32>}, {transform_indices = @transform_3, window_bounds = array<i64: 1>}, {transform_indices = @transform_4, window_bounds = array<i64: 1, 8>}]} {
    %c0_i32 = arith.constant 0 : i32
    %0 = arith.cmpi eq, %arg1, %c0_i32 : i32
    %1 = arith.extui %0 : i1 to i32
    %c0_i32_0 = arith.constant 0 : i32
    %2 = arith.cmpi ne, %1, %c0_i32_0 : i32
    scf.if %2 {
      %cst_17 = arith.constant 0.000000e+00 : f32
      %18 = vector.broadcast %cst_17 : f32 to vector<24x8xf32>
      %c0_18 = arith.constant 0 : index
      %c0_19 = arith.constant 0 : index
      %19 = vector.load %arg7[%c0_18, %c0_19] : memref<24x8xf32, #tpu.memory_space<vmem>>, vector<24x8xf32>
      tpu.vector_store %arg7[%c0_18, %c0_19], %18 {strides = array<i32>} : memref<24x8xf32, #tpu.memory_space<vmem>>, vector<24x8xf32>,
      %cst_20 = arith.constant 0.000000e+00 : f32
      %20 = vector.broadcast %cst_20 : f32 to vector<8x8xf32>
      %c0_21 = arith.constant 0 : index
      %c0_22 = arith.constant 0 : index
      %21 = vector.load %arg8[%c0_21, %c0_22] : memref<8x8xf32, #tpu.memory_space<vmem>>, vector<8x8xf32>
      tpu.vector_store %arg8[%c0_21, %c0_22], %20 {strides = array<i32>} : memref<8x8xf32, #tpu.memory_space<vmem>>, vector<8x8xf32>,
    } else {
    }
    %c0 = arith.constant 0 : index
    %c0_1 = arith.constant 0 : index
    %3 = vector.load %arg2[%c0, %c0_1] : memref<8x32xf32, #tpu.memory_space<vmem>>, vector<8x32xf32>
    %c0_2 = arith.constant 0 : index
    %c0_3 = arith.constant 0 : index
    %4 = vector.load %arg3[%c0_2, %c0_3] : memref<24x32xf32, #tpu.memory_space<vmem>>, vector<24x32xf32>
    %c0_4 = arith.constant 0 : index
    %c0_5 = arith.constant 0 : index
    %5 = vector.load %arg4[%c0_4, %c0_5] : memref<8x32xf32, #tpu.memory_space<vmem>>, vector<8x32xf32>
    %c0_6 = arith.constant 0 : index
    %c0_7 = arith.constant 0 : index
    %6 = vector.load %arg7[%c0_6, %c0_7] : memref<24x8xf32, #tpu.memory_space<vmem>>, vector<24x8xf32>
    %cst = arith.constant dense<0.000000e+00> : vector<24x8xf32>
    %7 = tpu.matmul %4, %3, %cst {dimension_numbers = #tpu.dot_dimension_numbers<[1], [1], [0], [0], [0, 0, 1, 0], [], []>} : vector<24x32xf32>, vector<8x32xf32>, vector<24x8xf32> -> vector<24x8xf32>
    %8 = arith.addf %6, %7 : vector<24x8xf32>
    %c0_8 = arith.constant 0 : index
    %c0_9 = arith.constant 0 : index
    %9 = vector.load %arg7[%c0_8, %c0_9] : memref<24x8xf32, #tpu.memory_space<vmem>>, vector<24x8xf32>
    tpu.vector_store %arg7[%c0_8, %c0_9], %8 {strides = array<i32>} : memref<24x8xf32, #tpu.memory_space<vmem>>, vector<24x8xf32>,
    %c0_10 = arith.constant 0 : index
    %c0_11 = arith.constant 0 : index
    %10 = vector.load %arg8[%c0_10, %c0_11] : memref<8x8xf32, #tpu.memory_space<vmem>>, vector<8x8xf32>
    %11 = arith.mulf %3, %3 : vector<8x32xf32>
    %cst_12 = arith.constant dense<0.000000e+00> : vector<8x8xf32>
    %12 = tpu.matmul %5, %11, %cst_12 {dimension_numbers = #tpu.dot_dimension_numbers<[1], [1], [0], [0], [0, 0, 1, 0], [], []>} : vector<8x32xf32>, vector<8x32xf32>, vector<8x8xf32> -> vector<8x8xf32>
    %13 = arith.addf %10, %12 : vector<8x8xf32>
    %c0_13 = arith.constant 0 : index
    %c0_14 = arith.constant 0 : index
    %14 = vector.load %arg8[%c0_13, %c0_14] : memref<8x8xf32, #tpu.memory_space<vmem>>, vector<8x8xf32>
    tpu.vector_store %arg8[%c0_13, %c0_14], %13 {strides = array<i32>} : memref<8x8xf32, #tpu.memory_space<vmem>>, vector<8x8xf32>,
    %c0_i32_15 = arith.constant 0 : i32
    %15 = arith.cmpi eq, %arg1, %c0_i32_15 : i32
    %16 = arith.extui %15 : i1 to i32
    %c0_i32_16 = arith.constant 0 : i32
    %17 = arith.cmpi ne, %16, %c0_i32_16 : i32
    scf.if %17 {
      %c0_17 = arith.constant 0 : index
      %c0_18 = arith.constant 0 : index
      %18 = vector.load %arg7[%c0_17, %c0_18] : memref<24x8xf32, #tpu.memory_space<vmem>>, vector<24x8xf32>
      %19 = tpu.iota {dimensions = array<i32: 0>} : vector<24x8xi32>
      %c16_i32 = arith.constant 16 : i32
      %20 = vector.broadcast %c16_i32 : i32 to vector<24x8xi32>
      %21 = arith.cmpi slt, %19, %20 : vector<24x8xi32>
      %cst_19 = arith.constant 5.000000e-01 : f32
      %cst_20 = arith.constant 0.000000e+00 : f32
      %22 = vector.broadcast %cst_19 : f32 to vector<24x8xf32>
      %23 = vector.broadcast %cst_20 : f32 to vector<24x8xf32>
      %24 = arith.select %21, %22, %23 : vector<24x8xi1>, vector<24x8xf32>
      %c16_i32_21 = arith.constant 16 : i32
      %25 = vector.broadcast %c16_i32_21 : i32 to vector<24x8xi32>
      %26 = arith.cmpi eq, %19, %25 : vector<24x8xi32>
      %cst_22 = arith.constant 1.000000e+00 : f32
      %cst_23 = arith.constant 0.000000e+00 : f32
      %27 = vector.broadcast %cst_22 : f32 to vector<24x8xf32>
      %28 = vector.broadcast %cst_23 : f32 to vector<24x8xf32>
      %29 = arith.select %26, %27, %28 : vector<24x8xi1>, vector<24x8xf32>
      %30 = arith.mulf %24, %18 : vector<24x8xf32>
      %31 = arith.mulf %30, %18 : vector<24x8xf32>
      %32 = arith.mulf %29, %18 : vector<24x8xf32>
      %33 = arith.addf %31, %32 : vector<24x8xf32>
      %cst_24 = arith.constant dense<0.000000e+00> : vector<8xf32>
      %34 = vector.multi_reduction <add>, %33, %cst_24 [0] : vector<24x8xf32> to vector<8xf32>
      %35 = vector.shape_cast %34 : vector<8xf32> to vector<1x8xf32>
      %c0_25 = arith.constant 0 : index
      %c0_26 = arith.constant 0 : index
      %36 = vector.load %arg8[%c0_25, %c0_26] : memref<8x8xf32, #tpu.memory_space<vmem>>, vector<8x8xf32>
      %cst_27 = arith.constant dense<0.000000e+00> : vector<8xf32>
      %37 = vector.multi_reduction <add>, %36, %cst_27 [0] : vector<8x8xf32> to vector<8xf32>
      %38 = vector.shape_cast %37 : vector<8xf32> to vector<1x8xf32>
      %c0_28 = arith.constant 0 : index
      %39 = memref.load %arg5[%c0_28] : memref<1xf32, #tpu.memory_space<smem>>
      %40 = vector.broadcast %39 : f32 to vector<1x8xf32>
      %41 = arith.addf %40, %35 : vector<1x8xf32>
      %cst_29 = arith.constant 5.000000e-01 : f32
      %42 = vector.broadcast %cst_29 : f32 to vector<1x8xf32>
      %43 = arith.mulf %42, %38 : vector<1x8xf32>
      %44 = arith.subf %41, %43 : vector<1x8xf32>
      %c0_30 = arith.constant 0 : index
      %c0_31 = arith.constant 0 : index
      %45 = vector.load %arg6[%c0_30, %c0_31] : memref<1x8xf32, #tpu.memory_space<vmem>>, vector<1x8xf32>
      tpu.vector_store %arg6[%c0_30, %c0_31], %44 {strides = array<i32>} : memref<1x8xf32, #tpu.memory_space<vmem>>, vector<1x8xf32>,
    } else {
    }
    return
  }
  func.func @transform_0(%arg0: i32, %arg1: i32) -> (i32, i32) {
    %c0_i32 = arith.constant 0 : i32
    return %arg0, %arg1 : i32, i32
  }
  func.func @transform_1(%arg0: i32, %arg1: i32) -> (i32, i32) {
    %c0_i32 = arith.constant 0 : i32
    %c0_i32_0 = arith.constant 0 : i32
    return %c0_i32, %arg1 : i32, i32
  }
  func.func @transform_2(%arg0: i32, %arg1: i32) -> (i32, i32) {
    %c0_i32 = arith.constant 0 : i32
    %c0_i32_0 = arith.constant 0 : i32
    return %c0_i32, %arg1 : i32, i32
  }
  func.func @transform_3(%arg0: i32, %arg1: i32) -> i32 {
    %c0_i32 = arith.constant 0 : i32
    %c0_i32_0 = arith.constant 0 : i32
    return %c0_i32 : i32
  }
  func.func @transform_4(%arg0: i32, %arg1: i32) -> (i32, i32) {
    %c0_i32 = arith.constant 0 : i32
    %c0_i32_0 = arith.constant 0 : i32
    return %arg0, %c0_i32 : i32, i32
  }
}

</mosaic_0001>

<llo_original>
// kernel: tpu_custom_call.1
$region0: #{tpu_custom_call.1}
  #allocation0 [shape = 'u32[]', space=smem, size = 0x4, offset = 0x4, fixed_abs, tag = 'smem constant byte address 0x4 - core index']
  #allocation1 [shape = 'u32[144,128]{1,0:T(1,128)}', space=vmem, size = 0x12000, scoped, tag = 'internal scratch']
  #allocation2 [shape = 'f32[24,8]{1,0:T(8,128)}', space=vmem, size = 0x3000, scoped, tag = 'scratch operand']
  #allocation3 [shape = 'f32[8,8]{1,0:T(8,128)}', space=vmem, size = 0x1000, scoped, tag = 'scratch operand']
  #allocation4 [shape = 'f32[1]{0:T(128)S(6)}', space=smem, size = 0x200, scoped, tag = 'scoped memory for tpu_custom_call.1']
  %s0 = inlined_call_operand.hbm [shape: f32[8,32], index: 0, kind: input, shape index: {}]
  %s1 = inlined_call_operand.hbm [shape: f32[24,32], index: 1, kind: input, shape index: {}]
  %s2 = inlined_call_operand.hbm [shape: f32[8,32], index: 2, kind: input, shape index: {}]
  %s3 = inlined_call_operand.<no memory space> [shape: f32[1], index: 3, kind: input, shape index: {}]
  %s4 = inlined_call_operand.hbm [shape: f32[1,8], index: 4, kind: output, shape index: {}]
  %s5 = sld [smem:[#allocation0]]
  $region46: #{tpu_custom_call.1} parent=0
    _
  %s7 = ssub.s32 1, %s5
  %s8 = scalar_select 0, %s7, %s5
  %9 = sst [smem:[#allocation4]] %s3
  $region1: #{tpu_custom_call.1} parent=0
    #allocation5 [shape = 'u8[4096]{0}', space=vmem, size = 0x1000, scoped, tag = 'input window, operand 0, single buffered']
    #allocation6 [shape = 's32[1]{0}', space=sflag, size = 0x4, scoped, tag = 'scoped memory for tpu_custom_call.1']
    #allocation7 [shape = 's32[1]{0}', space=sflag, size = 0x4, scoped, tag = 'scoped memory for tpu_custom_call.1']
    #allocation8 [shape = 'u8[12288]{0}', space=vmem, size = 0x3000, scoped, tag = 'input window, operand 1, single buffered']
    #allocation9 [shape = 's32[1]{0}', space=sflag, size = 0x4, scoped, tag = 'scoped memory for tpu_custom_call.1']
    #allocation10 [shape = 'u8[4096]{0}', space=vmem, size = 0x1000, scoped, tag = 'input window, operand 2, single buffered']
    #allocation11 [shape = 'u8[512]{0}', space=vmem, size = 0x400, scoped, tag = 'output window, operand 0, single buffered']
    %10 = vsyncpa [#allocation6], 0
    %11 = vsyncpa [#allocation9], 0
    %12 = vsyncpa [#allocation7], 0
    // Predicated region
    $region2: #{tpu_custom_call.1} parent=1 // pred_check
      _
    $region3: #{tpu_custom_call.1} parent=1 // pred_check_branch
      %14 = sbr.rel (0) target = $region5
    $region4: #{tpu_custom_call.1} parent=1 // pred_region
      %s16 = ssub.s32 128, 128
      %17 = vsyncadd [#allocation6], %s16
      %s19 = sshll.u32 [#allocation5], 4
      %s20 = int_to_ptr.vmem [resolvable:$true] %s19
      %22 = dma.hbm_to_vmem [thread:$0]  %s0, 128, %s20, [#allocation6]
    $region5: #{tpu_custom_call.1} parent=1 // pred_fallthru
      _
    // Predicated region
    $region6: #{tpu_custom_call.1} parent=1 // pred_check
      _
    $region7: #{tpu_custom_call.1} parent=1 // pred_check_branch
      %24 = sbr.rel (0) target = $region9
    $region8: #{tpu_custom_call.1} parent=1 // pred_region
      %s26 = ssub.s32 384, 384
      %27 = vsyncadd [#allocation9], %s26
      %s28 = sshll.u32 [#allocation8], 4
      %s29 = int_to_ptr.vmem [resolvable:$true] %s28
      %34 = dma.hbm_to_vmem [thread:$0]  %s1, 384, %s29, [#allocation9], 128, 128, 8
    $region9: #{tpu_custom_call.1} parent=1 // pred_fallthru
      _
    // Predicated region
    $region10: #{tpu_custom_call.1} parent=1 // pred_check
      _
    $region11: #{tpu_custom_call.1} parent=1 // pred_check_branch
      %36 = sbr.rel (0) target = $region13
    $region12: #{tpu_custom_call.1} parent=1 // pred_region
      %s38 = ssub.s32 128, 128
      %39 = vsyncadd [#allocation9], %s38
      %s41 = sshll.u32 [#allocation10], 4
      %s42 = int_to_ptr.vmem [resolvable:$true] %s41
      %44 = dma.hbm_to_vmem [thread:$0]  %s2, 128, %s42, [#allocation9]
    $region13: #{tpu_custom_call.1} parent=1 // pred_fallthru
      _
    // Predicated region
    $region14: #{tpu_custom_call.1} parent=1 // pred_check
      _
    $region15: #{tpu_custom_call.1} parent=1 // pred_check_branch
      %46 = sbr.rel (0) target = $region17
    $region16: #{tpu_custom_call.1} parent=1 // pred_region
      _
    $region17: #{tpu_custom_call.1} parent=1 // pred_fallthru
      _
    // Predicated region
    $region18: #{tpu_custom_call.1} parent=1 // pred_check
      _
    $region19: #{tpu_custom_call.1} parent=1 // pred_check_branch
      %48 = sbr.rel (0) target = $region21
    $region20: #{tpu_custom_call.1} parent=1 // pred_region
      %49 = dma.done [#allocation6], 128
    $region21: #{tpu_custom_call.1} parent=1 // pred_fallthru
      _
    // Predicated region
    $region22: #{tpu_custom_call.1} parent=1 // pred_check
      _
    $region23: #{tpu_custom_call.1} parent=1 // pred_check_branch
      %51 = sbr.rel (0) target = $region25
    $region24: #{tpu_custom_call.1} parent=1 // pred_region
      %52 = dma.done [#allocation9], 384
    $region25: #{tpu_custom_call.1} parent=1 // pred_fallthru
      _
    // Predicated region
    $region26: #{tpu_custom_call.1} parent=1 // pred_check
      _
    $region27: #{tpu_custom_call.1} parent=1 // pred_check_branch
      %54 = sbr.rel (0) target = $region29
    $region28: #{tpu_custom_call.1} parent=1 // pred_region
      %55 = dma.done [#allocation9], 128
    $region29: #{tpu_custom_call.1} parent=1 // pred_fallthru
      _
    %p56 = scmp.eq.s32.totalorder 0, 0
    // Predicated region
    $region30: #{tpu_custom_call.1} parent=1 // pred_check
      %p57 = pneg %p56
    $region31: #{tpu_custom_call.1} parent=1 // pred_check_branch
      %59 = sbr.rel (%p57) target = $region33
    $region32: #{tpu_custom_call.1} parent=1 // pred_region
      %vm60 = vcmask 64512
      %61 = vst.msk [vmem:[#allocation2] sm:$0xff] %vm60, 0.0
      %62 = vst.msk [vmem:[#allocation2 + $0x8] sm:$0xff] %vm60, 0.0
      %63 = vst.msk [vmem:[#allocation2 + $0x10] sm:$0xff] %vm60, 0.0
      %64 = vst.msk [vmem:[#allocation3] sm:$0xff] %vm60, 0.0
    $region33: #{tpu_custom_call.1} parent=1 // pred_fallthru
      _
    %v65 = vld [vmem:[#allocation5] sm:$0xff]
    %v66 = vld [vmem:[#allocation8] sm:$0xff]
    %v67 = vld [vmem:[#allocation8 + $0x8] sm:$0xff]
    %v68 = vld [vmem:[#allocation8 + $0x10] sm:$0xff]
    %v69 = vld [vmem:[#allocation10] sm:$0xff]
    %v70 = vld [vmem:[#allocation2] sm:$0xff]
    %v71 = vld [vmem:[#allocation2 + $0x8] sm:$0xff]
    %v72 = vld [vmem:[#allocation2 + $0x10] sm:$0xff]
    %vm73 = vcmask 261120
    %v75 = vsel %vm73, %v66, 0
    %v78 = vsel %vm73, %v67, 0
    %v81 = vsel %vm73, %v68, 0
    %v84 = vsel %vm73, %v65, 0
    %86 = vmatprep.subr.mxu0 0.0
    %87 = vmatpush1.xpose.msra.mxu0 0.0
    %88 = vmatprep.subr.mxu0 0.0
    %89 = vmatpush1.xpose.msra.mxu0 0.0
    %90 = vmatprep.subr.mxu0 0.0
    %91 = vmatpush1.xpose.msra.mxu0 0.0
    %92 = vmatprep.subr.mxu0 0.0
    %93 = vmatpush1.xpose.msra.mxu0 0.0
    %94 = vmatprep.subr.mxu0 0.0
    %95 = vmatpush1.xpose.msra.mxu0 0.0
    %96 = vmatprep.subr.mxu0 0.0
    %97 = vmatpush1.xpose.msra.mxu0 0.0
    %98 = vmatprep.subr.mxu0 0.0
    %99 = vmatpush1.xpose.msra.mxu0 0.0
    %100 = vmatprep.subr.mxu0 0.0
    %101 = vmatpush1.xpose.msra.mxu0 0.0
    %102 = vmatprep.subr.mxu0 0.0
    %103 = vmatpush1.xpose.msra.mxu0 0.0
    %104 = vmatprep.subr.mxu0 0.0
    %105 = vmatpush1.xpose.msra.mxu0 0.0
    %106 = vmatprep.subr.mxu0 0.0
    %107 = vmatpush1.xpose.msra.mxu0 0.0
    %108 = vmatprep.subr.mxu0 0.0
    %109 = vmatpush1.xpose.msra.mxu0 0.0
    %110 = vmatprep.subr.mxu0 0.0
    %111 = vmatpush1.xpose.msra.mxu0 0.0
    %112 = vmatprep.subr.mxu0 0.0
    %113 = vmatpush1.xpose.msra.mxu0 0.0
    %114 = vmatprep.subr.mxu0 0.0
    %115 = vmatpush1.xpose.msra.mxu0 0.0
    %116 = vmatprep.subr.mxu0 0.0
    %117 = vmatpush1.xpose.msra.mxu0 %v84
    %118 = vmatprep.subr.mxu0 0.0
    %119 = vmatpush2.xpose.msra.mxu0 0.0
    %120 = vmatprep.subr.mxu0 0.0
    %121 = vmatpush2.xpose.msra.mxu0 0.0
    %122 = vmatprep.subr.mxu0 0.0
    %123 = vmatpush2.xpose.msra.mxu0 0.0
    %124 = vmatprep.subr.mxu0 0.0
    %125 = vmatpush2.xpose.msra.mxu0 0.0
    %126 = vmatprep.subr.mxu0 0.0
    %127 = vmatpush2.xpose.msra.mxu0 0.0
    %128 = vmatprep.subr.mxu0 0.0
    %129 = vmatpush2.xpose.msra.mxu0 0.0
    %130 = vmatprep.subr.mxu0 0.0
    %131 = vmatpush2.xpose.msra.mxu0 0.0
    %132 = vmatprep.subr.mxu0 0.0
    %133 = vmatpush2.xpose.msra.mxu0 0.0
    %134 = vmatprep.subr.mxu0 0.0
    %135 = vmatpush2.xpose.msra.mxu0 0.0
    %136 = vmatprep.subr.mxu0 0.0
    %137 = vmatpush2.xpose.msra.mxu0 0.0
    %138 = vmatprep.subr.mxu0 0.0
    %139 = vmatpush2.xpose.msra.mxu0 0.0
    %140 = vmatprep.subr.mxu0 0.0
    %141 = vmatpush2.xpose.msra.mxu0 0.0
    %142 = vmatprep.subr.mxu0 0.0
    %143 = vmatpush2.xpose.msra.mxu0 0.0
    %144 = vmatprep.subr.mxu0 0.0
    %145 = vmatpush2.xpose.msra.mxu0 0.0
    %146 = vmatprep.subr.mxu0 0.0
    %147 = vmatpush2.xpose.msra.mxu0 0.0
    %148 = vmatprep.subr.mxu0 0.0
    %149 = vmatpush2.xpose.msra.mxu0 0.0
    %150 = vmatprep.mubr.f32.mxu0 0.0
    %151 = vmatmul.mubr.f32.gmra.mxu0 %v75
    %v152 = vpop.f32.mrf.mxu0
    %v153 = vadd.f32 0.0, %v152
    %v154 = vpop.f32.mrf.mxu0
    %155 = vmatprep.mubr.f32.mxu0 0.0
    %156 = vmatmul.mubr.f32.gmra.mxu0 %v78
    %v157 = vpop.f32.mrf.mxu0
    %v158 = vadd.f32 0.0, %v157
    %v159 = vpop.f32.mrf.mxu0
    %160 = vmatprep.mubr.f32.mxu0 0.0
    %161 = vmatmul.mubr.f32.gmra.mxu0 %v81
    %v162 = vpop.f32.mrf.mxu0
    %v163 = vadd.f32 0.0, %v162
    %v164 = vpop.f32.mrf.mxu0
    %165 = vdwg.mxu0
    %v166 = vadd.f32 %v70, %v153
    %v167 = vadd.f32 %v71, %v158
    %v168 = vadd.f32 %v72, %v163
    %vm169 = vcmask 64512
    %170 = vst.msk [vmem:[#allocation2] sm:$0xff] %vm169, %v166
    %171 = vst.msk [vmem:[#allocation2 + $0x8] sm:$0xff] %vm169, %v167
    %172 = vst.msk [vmem:[#allocation2 + $0x10] sm:$0xff] %vm169, %v168
    %v173 = vld [vmem:[#allocation3] sm:$0xff]
    %v174 = vmul.f32 %v65, %v65
    %v176 = vsel %vm73, %v69, 0
    %v179 = vsel %vm73, %v174, 0
    %181 = vmatprep.subr.mxu0 0.0
    %182 = vmatpush1.xpose.msra.mxu0 0.0
    %183 = vmatprep.subr.mxu0 0.0
    %184 = vmatpush1.xpose.msra.mxu0 0.0
    %185 = vmatprep.subr.mxu0 0.0
    %186 = vmatpush1.xpose.msra.mxu0 0.0
    %187 = vmatprep.subr.mxu0 0.0
    %188 = vmatpush1.xpose.msra.mxu0 0.0
    %189 = vmatprep.subr.mxu0 0.0
    %190 = vmatpush1.xpose.msra.mxu0 0.0
    %191 = vmatprep.subr.mxu0 0.0
    %192 = vmatpush1.xpose.msra.mxu0 0.0
    %193 = vmatprep.subr.mxu0 0.0
    %194 = vmatpush1.xpose.msra.mxu0 0.0
    %195 = vmatprep.subr.mxu0 0.0
    %196 = vmatpush1.xpose.msra.mxu0 0.0
    %197 = vmatprep.subr.mxu0 0.0
    %198 = vmatpush1.xpose.msra.mxu0 0.0
    %199 = vmatprep.subr.mxu0 0.0
    %200 = vmatpush1.xpose.msra.mxu0 0.0
    %201 = vmatprep.subr.mxu0 0.0
    %202 = vmatpush1.xpose.msra.mxu0 0.0
    %203 = vmatprep.subr.mxu0 0.0
    %204 = vmatpush1.xpose.msra.mxu0 0.0
    %205 = vmatprep.subr.mxu0 0.0
    %206 = vmatpush1.xpose.msra.mxu0 0.0
    %207 = vmatprep.subr.mxu0 0.0
    %208 = vmatpush1.xpose.msra.mxu0 0.0
    %209 = vmatprep.subr.mxu0 0.0
    %210 = vmatpush1.xpose.msra.mxu0 0.0
    %211 = vmatprep.subr.mxu0 0.0
    %212 = vmatpush1.xpose.msra.mxu0 %v179
    %213 = vmatprep.subr.mxu0 0.0
    %214 = vmatpush2.xpose.msra.mxu0 0.0
    %215 = vmatprep.subr.mxu0 0.0
    %216 = vmatpush2.xpose.msra.mxu0 0.0
    %217 = vmatprep.subr.mxu0 0.0
    %218 = vmatpush2.xpose.msra.mxu0 0.0
    %219 = vmatprep.subr.mxu0 0.0
    %220 = vmatpush2.xpose.msra.mxu0 0.0
    %221 = vmatprep.subr.mxu0 0.0
    %222 = vmatpush2.xpose.msra.mxu0 0.0
    %223 = vmatprep.subr.mxu0 0.0
    %224 = vmatpush2.xpose.msra.mxu0 0.0
    %225 = vmatprep.subr.mxu0 0.0
    %226 = vmatpush2.xpose.msra.mxu0 0.0
    %227 = vmatprep.subr.mxu0 0.0
    %228 = vmatpush2.xpose.msra.mxu0 0.0
    %229 = vmatprep.subr.mxu0 0.0
    %230 = vmatpush2.xpose.msra.mxu0 0.0
    %231 = vmatprep.subr.mxu0 0.0
    %232 = vmatpush2.xpose.msra.mxu0 0.0
    %233 = vmatprep.subr.mxu0 0.0
    %234 = vmatpush2.xpose.msra.mxu0 0.0
    %235 = vmatprep.subr.mxu0 0.0
    %236 = vmatpush2.xpose.msra.mxu0 0.0
    %237 = vmatprep.subr.mxu0 0.0
    %238 = vmatpush2.xpose.msra.mxu0 0.0
    %239 = vmatprep.subr.mxu0 0.0
    %240 = vmatpush2.xpose.msra.mxu0 0.0
    %241 = vmatprep.subr.mxu0 0.0
    %242 = vmatpush2.xpose.msra.mxu0 0.0
    %243 = vmatprep.subr.mxu0 0.0
    %244 = vmatpush2.xpose.msra.mxu0 0.0
    %245 = vmatprep.mubr.f32.mxu0 0.0
    %246 = vmatmul.mubr.f32.gmra.mxu0 %v176
    %v247 = vpop.f32.mrf.mxu0
    %v248 = vadd.f32 0.0, %v247
    %v249 = vpop.f32.mrf.mxu0
    %250 = vdwg.mxu0
    %v251 = vadd.f32 %v173, %v248
    %252 = vst.msk [vmem:[#allocation3] sm:$0xff] %vm169, %v251
    // Predicated region
    $region34: #{tpu_custom_call.1} parent=1 // pred_check
      %p253 = pneg %p56
    $region35: #{tpu_custom_call.1} parent=1 // pred_check_branch
      %255 = sbr.rel (%p253) target = $region37
    $region36: #{tpu_custom_call.1} parent=1 // pred_region
      %v256 = vld [vmem:[#allocation2] sm:$0xff]
      %v257 = vld [vmem:[#allocation2 + $0x8] sm:$0xff]
      %v258 = vld [vmem:[#allocation2 + $0x10] sm:$0xff]
      %v259 = vlaneseq
      %v260 = vshrl.u32 %v259, 7
      %v261 = vadd.s32 %v260, 8
      %v262 = vadd.s32 %v260, 16
      %vm263 = vcmp.lt.s32.totalorder %v260, 16
      %vm264 = vcmp.lt.s32.totalorder %v261, 16
      %vm265 = vcmp.lt.s32.totalorder %v262, 16
      %v266 = vsel %vm263, 0.5, 0.0
      %v267 = vsel %vm264, 0.5, 0.0
      %v268 = vsel %vm265, 0.5, 0.0
      %vm269 = vcmp.eq.s32.totalorder %v260, 16
      %vm270 = vcmp.eq.s32.totalorder %v261, 16
      %vm271 = vcmp.eq.s32.totalorder %v262, 16
      %v272 = vsel %vm269, 1.0, 0.0
      %v273 = vsel %vm270, 1.0, 0.0
      %v274 = vsel %vm271, 1.0, 0.0
      %v275 = vmul.f32 %v266, %v256
      %v276 = vmul.f32 %v267, %v257
      %v277 = vmul.f32 %v268, %v258
      %v278 = vmul.f32 %v275, %v256
      %v279 = vmul.f32 %v276, %v257
      %v280 = vmul.f32 %v277, %v258
      %v281 = vmul.f32 %v272, %v256
      %v282 = vmul.f32 %v273, %v257
      %v283 = vmul.f32 %v274, %v258
      %v284 = vadd.f32 %v278, %v281
      %v285 = vadd.f32 %v279, %v282
      %v286 = vadd.f32 %v280, %v283
      %v287 = vsel %vm169, %v284, 0.0
      %v288 = vsel %vm169, %v285, 0.0
      %v289 = vadd.f32 %v287, %v288
      %v290 = vsel %vm169, %v286, 0.0
      %v291 = vadd.f32 %v289, %v290
      %v292 = vrot.slane %v291, 4
      %v293 = vadd.f32 %v291, %v292
      %v294 = vrot.slane %v293, 2
      %v295 = vadd.f32 %v293, %v294
      %v296 = vrot.slane %v295, 1
      %v297 = vadd.f32 %v295, %v296
      %v298 = vld [vmem:[#allocation3] sm:$0xff]
      %v299 = vsel %vm169, %v298, 0.0
      %v300 = vrot.slane %v299, 4
      %v301 = vadd.f32 %v299, %v300
      %v302 = vrot.slane %v301, 2
      %v303 = vadd.f32 %v301, %v302
      %v304 = vrot.slane %v303, 1
      %v305 = vadd.f32 %v303, %v304
      %s306 = sld [smem:[#allocation4]]
      %v307 = vstv %s306
      %v308 = vadd.f32 %v307, %v297
      %v309 = vmul.f32 %v305, 0.5
      %v310 = vsub.f32 %v308, %v309
      %vm311 = vcmask 57344
      %312 = vst.msk [vmem:[#allocation11] sm:$0x1] %vm311, %v310
    $region37: #{tpu_custom_call.1} parent=1 // pred_fallthru
      _
    // Predicated region
    $region38: #{tpu_custom_call.1} parent=1 // pred_check
      _
    $region39: #{tpu_custom_call.1} parent=1 // pred_check_branch
      %314 = sbr.rel (0) target = $region41
    $region40: #{tpu_custom_call.1} parent=1 // pred_region
      %s316 = ssub.s32 16, 16
      %317 = vsyncadd [#allocation7], %s316
      %s319 = sshll.u32 [#allocation11], 4
      %s320 = int_to_ptr.vmem [resolvable:$true] %s319
      %322 = dma.vmem_to_hbm [thread:$0]  %s320, 16, %s4, [#allocation7]
    $region41: #{tpu_custom_call.1} parent=1 // pred_fallthru
      _
    // Predicated region
    $region42: #{tpu_custom_call.1} parent=1 // pred_check
      _
    $region43: #{tpu_custom_call.1} parent=1 // pred_check_branch
      %324 = sbr.rel (0) target = $region45
    $region44: #{tpu_custom_call.1} parent=1 // pred_region
      %325 = dma.done [#allocation7], 16
    $region45: #{tpu_custom_call.1} parent=1 // pred_fallthru
      _
    %326 = vsyncpa [#allocation6], 1
    %327 = vsyncpa [#allocation9], 1
    %328 = vsyncpa [#allocation7], 1

</llo_original>
